<compile_context>
chip_gen: v7x
topology: tpu7x:2x2x1
jax: 0.10.0
libtpu: 0.0.40
codegen_flags: <defaults>
</compile_context>

<pallas_src>
import jax
import jax.numpy as jnp
from jax.experimental import pallas as pl
from jax.experimental.pallas import tpu as pltpu


def _weighted_l2_numer_kernel(pred_ref, targ_ref, w_ref, mask_ref, out_ref):
    # pred/targ: (Bt, R, T)   w: (R, T) f32   mask: (Bt, R) f32   out: (Bt, 1) f32
    p = pred_ref[...].astype(jnp.float32)
    t = targ_ref[...].astype(jnp.float32)
    d = p - t
    q = d * d * w_ref[...]                       # (Bt, R, T), pure VPU work
    row_sums = jnp.sum(q, axis=-1)               # (Bt, R) per-row reduce (no carry)
    # Per-batch masked numerator: sum_r mask[b,r] * sum_t loss*w
    out_ref[...] = jnp.sum(row_sums * mask_ref[...], axis=-1, keepdims=True)


def weighted_loss(pred, targ, existence_mask, weights, action_dim):
    """Pallas implementation of WeightedLoss.forward (L2 _loss).

    pred, targ: [B, N, H, T]; existence_mask: [B, N, H]; weights: [N|1, H, T].
    Returns (weighted_loss, {'a0_loss': a0_loss}).
    """
    B, N, H, T = pred.shape
    R = N * H

    # Small side arrays prepared in f32 (cheap); big streams keep their dtype.
    w_full = jnp.broadcast_to(weights.astype(jnp.float32), (N, H, T)).reshape(R, T)
    mask2 = existence_mask.astype(jnp.float32).reshape(B, R)
    pred3 = pred.reshape(B, R, T)
    targ3 = targ.reshape(B, R, T)

    # Batch-block size: target a few MiB per input tile. Bt is a multiple of 8
    # (or the full batch) so (Bt, R) / (Bt, 1) blocks keep legal tiling.
    itemsize = max(pred.dtype.itemsize, targ.dtype.itemsize)
    per_b_bytes = R * T * itemsize
    tile_budget = 4 * 1024 * 1024
    if B <= 8 or per_b_bytes * B <= tile_budget:
        bt = B
    else:
        bt = max(8, min(B, ((tile_budget // max(per_b_bytes, 1)) // 8) * 8))
    grid = (pl.cdiv(B, bt),)
    # Partial last batch block is safe: all reductions are per-output-row, so
    # padded rows never contaminate valid rows and their writes are dropped.

    cost = pl.CostEstimate(
        flops=int(5 * B * R * T),
        transcendentals=0,
        bytes_accessed=int(pred3.size * pred.dtype.itemsize
                           + targ3.size * targ.dtype.itemsize
                           + w_full.size * 4 + mask2.size * 4 + B * 4),
    )

    numer = pl.pallas_call(
        _weighted_l2_numer_kernel,
        out_shape=jax.ShapeDtypeStruct((B, 1), jnp.float32),
        grid=grid,
        in_specs=[
            pl.BlockSpec((bt, R, T), lambda i: (i, 0, 0)),   # pred
            pl.BlockSpec((bt, R, T), lambda i: (i, 0, 0)),   # targ
            pl.BlockSpec((R, T), lambda i: (0, 0)),          # weights (resident)
            pl.BlockSpec((bt, R), lambda i: (i, 0)),         # existence mask
        ],
        out_specs=pl.BlockSpec((bt, 1), lambda i: (i, 0)),
        compiler_params=pltpu.CompilerParams(
            dimension_semantics=("parallel",),               # batch blocks → 2 TCs on v7x
            vmem_limit_bytes=32 * 1024 * 1024,
        ),
        cost_estimate=cost,
    )(pred3, targ3, w_full, mask2)[:, 0]                     # (B,)

    # O(B) normalization: (per-b sum / mask count) with the mean(-1) 1/T factor.
    denom = jnp.sum(mask2, axis=1)                           # (B,)
    weighted = jnp.mean(numer / (jnp.float32(T) * denom))

    # TODO(synk): tiny a0_loss epilogue (O(B*N*action_dim)) done in plain JAX;
    #             the O(B*N*H*T) stream is the Pallas kernel above.
    A = action_dim
    l0 = jnp.square(pred[:, :, 0, -A:].astype(jnp.float32)
                    - targ[:, :, 0, -A:].astype(jnp.float32))          # (B, N, A)
    a0 = jnp.mean(l0 * existence_mask[:, :, :1].astype(jnp.float32)
                  / weights[:, :1, -A:].astype(jnp.float32))
    return weighted, {"a0_loss": a0}


if __name__ == "__main__":
    key = jax.random.PRNGKey(0)
    k_pred, k_targ, k_w, k_m = jax.random.split(key, 4)

    B, N, H, T, A = 4, 3, 16, 32, 8   # batch x n_agents x horizon x transition_dim
    pred = jax.random.normal(k_pred, (B, N, H, T), dtype=jnp.float32)
    targ = jax.random.normal(k_targ, (B, N, H, T), dtype=jnp.float32)
    # Registered-buffer weights, shared across agents (leading dim 1), positive.
    weights = jax.random.uniform(k_w, (1, H, T), dtype=jnp.float32,
                                 minval=0.5, maxval=1.5)
    mask = (jax.random.uniform(k_m, (B, N, H)) > 0.3).astype(jnp.float32)
    mask = mask.at[:, :, 0].set(1.0)   # every batch element has nonzero mask sum

    loss, info = weighted_loss(pred, targ, mask, weights, A)
    loss = jax.block_until_ready(loss)
    a0 = jax.block_until_ready(info["a0_loss"])

    # Plain-JAX reference of the PyTorch forward (with L2 _loss).
    l = (pred - targ) ** 2
    wl = (l * weights[None] * mask[..., None]).mean(-1)
    wl_ref = (wl.sum((1, 2)) / mask.sum((1, 2))).mean()
    a0_ref = (l[:, :, 0, -A:] * mask[:, :, :1] / weights[:, :1, -A:]).mean()

    assert jnp.allclose(loss, wl_ref, rtol=1e-5, atol=1e-6), (loss, wl_ref)
    assert jnp.allclose(a0, a0_ref, rtol=1e-5, atol=1e-6), (a0, a0_ref)

    print("KERNEL_OK")
</pallas_src>

<mosaic_0001>
module attributes {stable_mosaic.version = 11 : i64} {
  func.func @_weighted_l2_numer_kernel(%arg0: i32, %arg1: memref<4x48x32xf32, #tpu.memory_space<vmem>>, %arg2: memref<4x48x32xf32, #tpu.memory_space<vmem>>, %arg3: memref<48x32xf32, #tpu.memory_space<vmem>>, %arg4: memref<4x48xf32, #tpu.memory_space<vmem>>, %arg5: memref<4x1xf32, #tpu.memory_space<vmem>>) attributes {dimension_semantics = [#tpu.dimension_semantics<parallel>], iteration_bounds = array<i64: 1>, scalar_prefetch = 0 : i64, scratch_operands = 0 : i64, tpu.core_type = #tpu.core_type<tc>, window_params = [{transform_indices = @transform_0, window_bounds = array<i64: 4, 48, 32>}, {transform_indices = @transform_1, window_bounds = array<i64: 4, 48, 32>}, {pipeline_mode = #tpu.pipeline_mode<synchronous>, transform_indices = @transform_2, window_bounds = array<i64: 48, 32>}, {transform_indices = @transform_3, window_bounds = array<i64: 4, 48>}, {transform_indices = @transform_4, window_bounds = array<i64: 4, 1>}]} {
    %c0 = arith.constant 0 : index
    %c0_0 = arith.constant 0 : index
    %c0_1 = arith.constant 0 : index
    %0 = vector.load %arg1[%c0, %c0_0, %c0_1] : memref<4x48x32xf32, #tpu.memory_space<vmem>>, vector<4x48x32xf32>
    %c0_2 = arith.constant 0 : index
    %c0_3 = arith.constant 0 : index
    %c0_4 = arith.constant 0 : index
    %1 = vector.load %arg2[%c0_2, %c0_3, %c0_4] : memref<4x48x32xf32, #tpu.memory_space<vmem>>, vector<4x48x32xf32>
    %2 = arith.subf %0, %1 : vector<4x48x32xf32>
    %3 = arith.mulf %2, %2 : vector<4x48x32xf32>
    %c0_5 = arith.constant 0 : index
    %c0_6 = arith.constant 0 : index
    %4 = vector.load %arg3[%c0_5, %c0_6] : memref<48x32xf32, #tpu.memory_space<vmem>>, vector<48x32xf32>
    %5 = vector.shape_cast %4 : vector<48x32xf32> to vector<1x48x32xf32>
    %6 = vector.broadcast %5 : vector<1x48x32xf32> to vector<4x48x32xf32>
    %7 = arith.mulf %3, %6 : vector<4x48x32xf32>
    %cst = arith.constant dense<0.000000e+00> : vector<4x48xf32>
    %8 = vector.multi_reduction <add>, %7, %cst [2] : vector<4x48x32xf32> to vector<4x48xf32>
    %c0_7 = arith.constant 0 : index
    %c0_8 = arith.constant 0 : index
    %9 = vector.load %arg4[%c0_7, %c0_8] : memref<4x48xf32, #tpu.memory_space<vmem>>, vector<4x48xf32>
    %10 = arith.mulf %8, %9 : vector<4x48xf32>
    %cst_9 = arith.constant dense<0.000000e+00> : vector<4xf32>
    %11 = vector.multi_reduction <add>, %10, %cst_9 [1] : vector<4x48xf32> to vector<4xf32>
    %12 = vector.shape_cast %11 : vector<4xf32> to vector<4x1xf32>
    %c0_10 = arith.constant 0 : index
    %c0_11 = arith.constant 0 : index
    %13 = vector.load %arg5[%c0_10, %c0_11] : memref<4x1xf32, #tpu.memory_space<vmem>>, vector<4x1xf32>
    tpu.vector_store %arg5[%c0_10, %c0_11], %12 {strides = array<i32>} : memref<4x1xf32, #tpu.memory_space<vmem>>, vector<4x1xf32>,
    return
  }
  func.func @transform_0(%arg0: i32) -> (i32, i32, i32) {
    %c0_i32 = arith.constant 0 : i32
    %c0_i32_0 = arith.constant 0 : i32
    %c0_i32_1 = arith.constant 0 : i32
    return %arg0, %c0_i32, %c0_i32_0 : i32, i32, i32
  }
  func.func @transform_1(%arg0: i32) -> (i32, i32, i32) {
    %c0_i32 = arith.constant 0 : i32
    %c0_i32_0 = arith.constant 0 : i32
    %c0_i32_1 = arith.constant 0 : i32
    return %arg0, %c0_i32, %c0_i32_0 : i32, i32, i32
  }
  func.func @transform_2(%arg0: i32) -> (i32, i32) {
    %c0_i32 = arith.constant 0 : i32
    %c0_i32_0 = arith.constant 0 : i32
    %c0_i32_1 = arith.constant 0 : i32
    return %c0_i32, %c0_i32_0 : i32, i32
  }
  func.func @transform_3(%arg0: i32) -> (i32, i32) {
    %c0_i32 = arith.constant 0 : i32
    %c0_i32_0 = arith.constant 0 : i32
    return %arg0, %c0_i32 : i32, i32
  }
  func.func @transform_4(%arg0: i32) -> (i32, i32) {
    %c0_i32 = arith.constant 0 : i32
    %c0_i32_0 = arith.constant 0 : i32
    return %arg0, %c0_i32 : i32, i32
  }
}

</mosaic_0001>

<llo_original>
// kernel: tpu_custom_call.1
$region0: #{tpu_custom_call.1}
  #allocation0 [shape = 'u32[]', space=smem, size = 0x4, offset = 0x4, fixed_abs, tag = 'smem constant byte address 0x4 - core index']
  #allocation1 [shape = 'u32[144,128]{1,0:T(1,128)}', space=vmem, size = 0x12000, scoped, tag = 'internal scratch']
  %s0 = inlined_call_operand.vmem [shape: f32[4,48,32], index: 0, kind: input, shape index: {}]
  %s1 = inlined_call_operand.vmem [shape: f32[4,48,32], index: 1, kind: input, shape index: {}]
  %s2 = inlined_call_operand.vmem [shape: f32[48,32], index: 2, kind: input, shape index: {}]
  %s3 = inlined_call_operand.vmem [shape: f32[4,48], index: 3, kind: input, shape index: {}]
  %s4 = inlined_call_operand.vmem [shape: f32[4,1], index: 4, kind: output, shape index: {}]
  %s5 = sld [smem:[#allocation0]]
  $region26: #{tpu_custom_call.1} parent=0
    _
  %s7 = ssub.s32 1, %s5
  %s8 = scalar_select 0, %s7, %s5
  // Predicated region
  $region2: #{tpu_custom_call.1} parent=0 // pred_check
    _
  $region3: #{tpu_custom_call.1} parent=0 // pred_check_branch
    %10 = sbr.rel (0) target = $region5
  $region4: #{tpu_custom_call.1} parent=0 // pred_region
    _
  $region5: #{tpu_custom_call.1} parent=0 // pred_fallthru
    _
  // Predicated region
  $region6: #{tpu_custom_call.1} parent=0 // pred_check
    _
  $region7: #{tpu_custom_call.1} parent=0 // pred_check_branch
    %12 = sbr.rel (0) target = $region9
  $region8: #{tpu_custom_call.1} parent=0 // pred_region
    _
  $region9: #{tpu_custom_call.1} parent=0 // pred_fallthru
    _
  // Predicated region
  $region10: #{tpu_custom_call.1} parent=0 // pred_check
    _
  $region11: #{tpu_custom_call.1} parent=0 // pred_check_branch
    %14 = sbr.rel (0) target = $region13
  $region12: #{tpu_custom_call.1} parent=0 // pred_region
    _
  $region13: #{tpu_custom_call.1} parent=0 // pred_fallthru
    _
  // Predicated region
  $region14: #{tpu_custom_call.1} parent=0 // pred_check
    _
  $region15: #{tpu_custom_call.1} parent=0 // pred_check_branch
    %16 = sbr.rel (0) target = $region17
  $region16: #{tpu_custom_call.1} parent=0 // pred_region
    _
  $region17: #{tpu_custom_call.1} parent=0 // pred_fallthru
    _
  %v17 = vld [vmem:[%s0] sm:$0xff]
  %v18 = vld [vmem:[%s0 + $0x8] sm:$0xff]
  %v19 = vld [vmem:[%s0 + $0x10] sm:$0xff]
  %v20 = vld [vmem:[%s0 + $0x18] sm:$0xff]
  %v21 = vld [vmem:[%s0 + $0x20] sm:$0xff]
  %v22 = vld [vmem:[%s0 + $0x28] sm:$0xff]
  %v23 = vld [vmem:[%s0 + $0x30] sm:$0xff]
  %v24 = vld [vmem:[%s0 + $0x38] sm:$0xff]
  %v25 = vld [vmem:[%s0 + $0x40] sm:$0xff]
  %v26 = vld [vmem:[%s0 + $0x48] sm:$0xff]
  %v27 = vld [vmem:[%s0 + $0x50] sm:$0xff]
  %v28 = vld [vmem:[%s0 + $0x58] sm:$0xff]
  %v29 = vld [vmem:[%s0 + $0x60] sm:$0xff]
  %v30 = vld [vmem:[%s0 + $0x68] sm:$0xff]
  %v31 = vld [vmem:[%s0 + $0x70] sm:$0xff]
  %v32 = vld [vmem:[%s0 + $0x78] sm:$0xff]
  %v33 = vld [vmem:[%s0 + $0x80] sm:$0xff]
  %v34 = vld [vmem:[%s0 + $0x88] sm:$0xff]
  %v35 = vld [vmem:[%s0 + $0x90] sm:$0xff]
  %v36 = vld [vmem:[%s0 + $0x98] sm:$0xff]
  %v37 = vld [vmem:[%s0 + $0xa0] sm:$0xff]
  %v38 = vld [vmem:[%s0 + $0xa8] sm:$0xff]
  %v39 = vld [vmem:[%s0 + $0xb0] sm:$0xff]
  %v40 = vld [vmem:[%s0 + $0xb8] sm:$0xff]
  %v41 = vld [vmem:[%s1] sm:$0xff]
  %v42 = vld [vmem:[%s1 + $0x8] sm:$0xff]
  %v43 = vld [vmem:[%s1 + $0x10] sm:$0xff]
  %v44 = vld [vmem:[%s1 + $0x18] sm:$0xff]
  %v45 = vld [vmem:[%s1 + $0x20] sm:$0xff]
  %v46 = vld [vmem:[%s1 + $0x28] sm:$0xff]
  %v47 = vld [vmem:[%s1 + $0x30] sm:$0xff]
  %v48 = vld [vmem:[%s1 + $0x38] sm:$0xff]
  %v49 = vld [vmem:[%s1 + $0x40] sm:$0xff]
  %v50 = vld [vmem:[%s1 + $0x48] sm:$0xff]
  %v51 = vld [vmem:[%s1 + $0x50] sm:$0xff]
  %v52 = vld [vmem:[%s1 + $0x58] sm:$0xff]
  %v53 = vld [vmem:[%s1 + $0x60] sm:$0xff]
  %v54 = vld [vmem:[%s1 + $0x68] sm:$0xff]
  %v55 = vld [vmem:[%s1 + $0x70] sm:$0xff]
  %v56 = vld [vmem:[%s1 + $0x78] sm:$0xff]
  %v57 = vld [vmem:[%s1 + $0x80] sm:$0xff]
  %v58 = vld [vmem:[%s1 + $0x88] sm:$0xff]
  %v59 = vld [vmem:[%s1 + $0x90] sm:$0xff]
  %v60 = vld [vmem:[%s1 + $0x98] sm:$0xff]
  %v61 = vld [vmem:[%s1 + $0xa0] sm:$0xff]
  %v62 = vld [vmem:[%s1 + $0xa8] sm:$0xff]
  %v63 = vld [vmem:[%s1 + $0xb0] sm:$0xff]
  %v64 = vld [vmem:[%s1 + $0xb8] sm:$0xff]
  %v65 = vsub.f32 %v17, %v41
  %v66 = vsub.f32 %v18, %v42
  %v67 = vsub.f32 %v19, %v43
  %v68 = vsub.f32 %v20, %v44
  %v69 = vsub.f32 %v21, %v45
  %v70 = vsub.f32 %v22, %v46
  %v71 = vsub.f32 %v23, %v47
  %v72 = vsub.f32 %v24, %v48
  %v73 = vsub.f32 %v25, %v49
  %v74 = vsub.f32 %v26, %v50
  %v75 = vsub.f32 %v27, %v51
  %v76 = vsub.f32 %v28, %v52
  %v77 = vsub.f32 %v29, %v53
  %v78 = vsub.f32 %v30, %v54
  %v79 = vsub.f32 %v31, %v55
  %v80 = vsub.f32 %v32, %v56
  %v81 = vsub.f32 %v33, %v57
  %v82 = vsub.f32 %v34, %v58
  %v83 = vsub.f32 %v35, %v59
  %v84 = vsub.f32 %v36, %v60
  %v85 = vsub.f32 %v37, %v61
  %v86 = vsub.f32 %v38, %v62
  %v87 = vsub.f32 %v39, %v63
  %v88 = vsub.f32 %v40, %v64
  %v89 = vmul.f32 %v65, %v65
  %v90 = vmul.f32 %v66, %v66
  %v91 = vmul.f32 %v67, %v67
  %v92 = vmul.f32 %v68, %v68
  %v93 = vmul.f32 %v69, %v69
  %v94 = vmul.f32 %v70, %v70
  %v95 = vmul.f32 %v71, %v71
  %v96 = vmul.f32 %v72, %v72
  %v97 = vmul.f32 %v73, %v73
  %v98 = vmul.f32 %v74, %v74
  %v99 = vmul.f32 %v75, %v75
  %v100 = vmul.f32 %v76, %v76
  %v101 = vmul.f32 %v77, %v77
  %v102 = vmul.f32 %v78, %v78
  %v103 = vmul.f32 %v79, %v79
  %v104 = vmul.f32 %v80, %v80
  %v105 = vmul.f32 %v81, %v81
  %v106 = vmul.f32 %v82, %v82
  %v107 = vmul.f32 %v83, %v83
  %v108 = vmul.f32 %v84, %v84
  %v109 = vmul.f32 %v85, %v85
  %v110 = vmul.f32 %v86, %v86
  %v111 = vmul.f32 %v87, %v87
  %v112 = vmul.f32 %v88, %v88
  %v113 = vld [vmem:[%s2] sm:$0xff]
  %v114 = vld [vmem:[%s2 + $0x8] sm:$0xff]
  %v115 = vld [vmem:[%s2 + $0x10] sm:$0xff]
  %v116 = vld [vmem:[%s2 + $0x18] sm:$0xff]
  %v117 = vld [vmem:[%s2 + $0x20] sm:$0xff]
  %v118 = vld [vmem:[%s2 + $0x28] sm:$0xff]
  %v119 = vmul.f32 %v89, %v113
  %v120 = vmul.f32 %v90, %v114
  %v121 = vmul.f32 %v91, %v115
  %v122 = vmul.f32 %v92, %v116
  %v123 = vmul.f32 %v93, %v117
  %v124 = vmul.f32 %v94, %v118
  %v125 = vmul.f32 %v95, %v113
  %v126 = vmul.f32 %v96, %v114
  %v127 = vmul.f32 %v97, %v115
  %v128 = vmul.f32 %v98, %v116
  %v129 = vmul.f32 %v99, %v117
  %v130 = vmul.f32 %v100, %v118
  %v131 = vmul.f32 %v101, %v113
  %v132 = vmul.f32 %v102, %v114
  %v133 = vmul.f32 %v103, %v115
  %v134 = vmul.f32 %v104, %v116
  %v135 = vmul.f32 %v105, %v117
  %v136 = vmul.f32 %v106, %v118
  %v137 = vmul.f32 %v107, %v113
  %v138 = vmul.f32 %v108, %v114
  %v139 = vmul.f32 %v109, %v115
  %v140 = vmul.f32 %v110, %v116
  %v141 = vmul.f32 %v111, %v117
  %v142 = vmul.f32 %v112, %v118
  %vm143 = vcmask 261120
  %v144 = vsel %vm143, %v119, 0.0
  %145 = vadd.xlane.f32.xlu0 %v144
  %v146 = vpop.xlane.xlu0 %145
  %v147 = vsel %vm143, %v120, 0.0
  %148 = vadd.xlane.f32.xlu0 %v147
  %v149 = vpop.xlane.xlu0 %148
  %v150 = vsel %vm143, %v121, 0.0
  %151 = vadd.xlane.f32.xlu0 %v150
  %v152 = vpop.xlane.xlu0 %151
  %v153 = vsel %vm143, %v122, 0.0
  %154 = vadd.xlane.f32.xlu0 %v153
  %v155 = vpop.xlane.xlu0 %154
  %v156 = vsel %vm143, %v123, 0.0
  %157 = vadd.xlane.f32.xlu0 %v156
  %v158 = vpop.xlane.xlu0 %157
  %v159 = vsel %vm143, %v124, 0.0
  %160 = vadd.xlane.f32.xlu0 %v159
  %v161 = vpop.xlane.xlu0 %160
  %v162 = vsel %vm143, %v125, 0.0
  %163 = vadd.xlane.f32.xlu0 %v162
  %v164 = vpop.xlane.xlu0 %163
  %v165 = vsel %vm143, %v126, 0.0
  %166 = vadd.xlane.f32.xlu0 %v165
  %v167 = vpop.xlane.xlu0 %166
  %v168 = vsel %vm143, %v127, 0.0
  %169 = vadd.xlane.f32.xlu0 %v168
  %v170 = vpop.xlane.xlu0 %169
  %v171 = vsel %vm143, %v128, 0.0
  %172 = vadd.xlane.f32.xlu0 %v171
  %v173 = vpop.xlane.xlu0 %172
  %v174 = vsel %vm143, %v129, 0.0
  %175 = vadd.xlane.f32.xlu0 %v174
  %v176 = vpop.xlane.xlu0 %175
  %v177 = vsel %vm143, %v130, 0.0
  %178 = vadd.xlane.f32.xlu0 %v177
  %v179 = vpop.xlane.xlu0 %178
  %v180 = vsel %vm143, %v131, 0.0
  %181 = vadd.xlane.f32.xlu0 %v180
  %v182 = vpop.xlane.xlu0 %181
  %v183 = vsel %vm143, %v132, 0.0
  %184 = vadd.xlane.f32.xlu0 %v183
  %v185 = vpop.xlane.xlu0 %184
  %v186 = vsel %vm143, %v133, 0.0
  %187 = vadd.xlane.f32.xlu0 %v186
  %v188 = vpop.xlane.xlu0 %187
  %v189 = vsel %vm143, %v134, 0.0
  %190 = vadd.xlane.f32.xlu0 %v189
  %v191 = vpop.xlane.xlu0 %190
  %v192 = vsel %vm143, %v135, 0.0
  %193 = vadd.xlane.f32.xlu0 %v192
  %v194 = vpop.xlane.xlu0 %193
  %v195 = vsel %vm143, %v136, 0.0
  %196 = vadd.xlane.f32.xlu0 %v195
  %v197 = vpop.xlane.xlu0 %196
  %v198 = vsel %vm143, %v137, 0.0
  %199 = vadd.xlane.f32.xlu0 %v198
  %v200 = vpop.xlane.xlu0 %199
  %v201 = vsel %vm143, %v138, 0.0
  %202 = vadd.xlane.f32.xlu0 %v201
  %v203 = vpop.xlane.xlu0 %202
  %v204 = vsel %vm143, %v139, 0.0
  %205 = vadd.xlane.f32.xlu0 %v204
  %v206 = vpop.xlane.xlu0 %205
  %v207 = vsel %vm143, %v140, 0.0
  %208 = vadd.xlane.f32.xlu0 %v207
  %v209 = vpop.xlane.xlu0 %208
  %v210 = vsel %vm143, %v141, 0.0
  %211 = vadd.xlane.f32.xlu0 %v210
  %v212 = vpop.xlane.xlu0 %211
  %v213 = vsel %vm143, %v142, 0.0
  %214 = vadd.xlane.f32.xlu0 %v213
  %v215 = vpop.xlane.xlu0 %214
  %v216 = vld [vmem:[%s3] sm:$0xf]
  %v218 = vlaneseq
  %v219 = vshrl.u32 %v218, 7
  %v220 = vsub.s32 0, %v219
  %v221 = vrot.slane %v216, %v220
  %223 = vbcast.lane.b32.xlu0 %v221, 256
  %v224 = vpop.permute.xlu0 %223
  %s226 = sor.u32 256, 8
  %227 = vbcast.lane.b32.xlu0 %v221, %s226
  %v228 = vpop.permute.xlu0 %227
  %s230 = sor.u32 256, 16
  %231 = vbcast.lane.b32.xlu0 %v221, %s230
  %v232 = vpop.permute.xlu0 %231
  %s234 = sor.u32 256, 24
  %235 = vbcast.lane.b32.xlu0 %v221, %s234
  %v236 = vpop.permute.xlu0 %235
  %s238 = sor.u32 256, 32
  %239 = vbcast.lane.b32.xlu0 %v221, %s238
  %v240 = vpop.permute.xlu0 %239
  %s242 = sor.u32 256, 40
  %243 = vbcast.lane.b32.xlu0 %v221, %s242
  %v244 = vpop.permute.xlu0 %243
  %v245 = vlaneseq
  %v246 = vshrl.u32 %v245, 7
  %v247 = vsub.s32 1, %v246
  %v248 = vrot.slane %v216, %v247
  %250 = vbcast.lane.b32.xlu0 %v248, 256
  %v251 = vpop.permute.xlu0 %250
  %s253 = sor.u32 256, 8
  %254 = vbcast.lane.b32.xlu0 %v248, %s253
  %v255 = vpop.permute.xlu0 %254
  %s257 = sor.u32 256, 16
  %258 = vbcast.lane.b32.xlu0 %v248, %s257
  %v259 = vpop.permute.xlu0 %258
  %s261 = sor.u32 256, 24
  %262 = vbcast.lane.b32.xlu0 %v248, %s261
  %v263 = vpop.permute.xlu0 %262
  %s265 = sor.u32 256, 32
  %266 = vbcast.lane.b32.xlu0 %v248, %s265
  %v267 = vpop.permute.xlu0 %266
  %s269 = sor.u32 256, 40
  %270 = vbcast.lane.b32.xlu0 %v248, %s269
  %v271 = vpop.permute.xlu0 %270
  %v272 = vlaneseq
  %v273 = vshrl.u32 %v272, 7
  %v274 = vsub.s32 2, %v273
  %v275 = vrot.slane %v216, %v274
  %277 = vbcast.lane.b32.xlu0 %v275, 256
  %v278 = vpop.permute.xlu0 %277
  %s280 = sor.u32 256, 8
  %281 = vbcast.lane.b32.xlu0 %v275, %s280
  %v282 = vpop.permute.xlu0 %281
  %s284 = sor.u32 256, 16
  %285 = vbcast.lane.b32.xlu0 %v275, %s284
  %v286 = vpop.permute.xlu0 %285
  %s288 = sor.u32 256, 24
  %289 = vbcast.lane.b32.xlu0 %v275, %s288
  %v290 = vpop.permute.xlu0 %289
  %s292 = sor.u32 256, 32
  %293 = vbcast.lane.b32.xlu0 %v275, %s292
  %v294 = vpop.permute.xlu0 %293
  %s296 = sor.u32 256, 40
  %297 = vbcast.lane.b32.xlu0 %v275, %s296
  %v298 = vpop.permute.xlu0 %297
  %v299 = vlaneseq
  %v300 = vshrl.u32 %v299, 7
  %v301 = vsub.s32 3, %v300
  %v302 = vrot.slane %v216, %v301
  %304 = vbcast.lane.b32.xlu0 %v302, 256
  %v305 = vpop.permute.xlu0 %304
  %s307 = sor.u32 256, 8
  %308 = vbcast.lane.b32.xlu0 %v302, %s307
  %v309 = vpop.permute.xlu0 %308
  %s311 = sor.u32 256, 16
  %312 = vbcast.lane.b32.xlu0 %v302, %s311
  %v313 = vpop.permute.xlu0 %312
  %s315 = sor.u32 256, 24
  %316 = vbcast.lane.b32.xlu0 %v302, %s315
  %v317 = vpop.permute.xlu0 %316
  %s319 = sor.u32 256, 32
  %320 = vbcast.lane.b32.xlu0 %v302, %s319
  %v321 = vpop.permute.xlu0 %320
  %s323 = sor.u32 256, 40
  %324 = vbcast.lane.b32.xlu0 %v302, %s323
  %v325 = vpop.permute.xlu0 %324
  %v350 = vmul.f32 %v146, %v224
  %v351 = vmul.f32 %v149, %v228
  %v352 = vmul.f32 %v152, %v232
  %v353 = vmul.f32 %v155, %v236
  %v354 = vmul.f32 %v158, %v240
  %v355 = vmul.f32 %v161, %v244
  %v356 = vmul.f32 %v164, %v251
  %v357 = vmul.f32 %v167, %v255
  %v358 = vmul.f32 %v170, %v259
  %v359 = vmul.f32 %v173, %v263
  %v360 = vmul.f32 %v176, %v267
  %v361 = vmul.f32 %v179, %v271
  %v362 = vmul.f32 %v182, %v278
  %v363 = vmul.f32 %v185, %v282
  %v364 = vmul.f32 %v188, %v286
  %v365 = vmul.f32 %v191, %v290
  %v366 = vmul.f32 %v194, %v294
  %v367 = vmul.f32 %v197, %v298
  %v368 = vmul.f32 %v200, %v305
  %v369 = vmul.f32 %v203, %v309
  %v370 = vmul.f32 %v206, %v313
  %v371 = vmul.f32 %v209, %v317
  %v372 = vmul.f32 %v212, %v321
  %v373 = vmul.f32 %v215, %v325
  %398 = vset.pattern.permute.xlu0 0
  %399 = vperm.xlu0 %398, %v350
  %v400 = vpop.permute.xlu0 %399
  %401 = vset.pattern.permute.xlu0 0
  %402 = vperm.xlu0 %401, %v351
  %v403 = vpop.permute.xlu0 %402
  %404 = vset.pattern.permute.xlu0 0
  %405 = vperm.xlu0 %404, %v352
  %v406 = vpop.permute.xlu0 %405
  %407 = vset.pattern.permute.xlu0 0
  %408 = vperm.xlu0 %407, %v353
  %v409 = vpop.permute.xlu0 %408
  %410 = vset.pattern.permute.xlu0 0
  %411 = vperm.xlu0 %410, %v354
  %v412 = vpop.permute.xlu0 %411
  %413 = vset.pattern.permute.xlu0 0
  %414 = vperm.xlu0 %413, %v355
  %v415 = vpop.permute.xlu0 %414
  %416 = vset.pattern.permute.xlu0 0
  %417 = vperm.xlu0 %416, %v356
  %v418 = vpop.permute.xlu0 %417
  %419 = vset.pattern.permute.xlu0 0
  %420 = vperm.xlu0 %419, %v357
  %v421 = vpop.permute.xlu0 %420
  %422 = vset.pattern.permute.xlu0 0
  %423 = vperm.xlu0 %422, %v358
  %v424 = vpop.permute.xlu0 %423
  %425 = vset.pattern.permute.xlu0 0
  %426 = vperm.xlu0 %425, %v359
  %v427 = vpop.permute.xlu0 %426
  %428 = vset.pattern.permute.xlu0 0
  %429 = vperm.xlu0 %428, %v360
  %v430 = vpop.permute.xlu0 %429
  %431 = vset.pattern.permute.xlu0 0
  %432 = vperm.xlu0 %431, %v361
  %v433 = vpop.permute.xlu0 %432
  %434 = vset.pattern.permute.xlu0 0
  %435 = vperm.xlu0 %434, %v362
  %v436 = vpop.permute.xlu0 %435
  %437 = vset.pattern.permute.xlu0 0
  %438 = vperm.xlu0 %437, %v363
  %v439 = vpop.permute.xlu0 %438
  %440 = vset.pattern.permute.xlu0 0
  %441 = vperm.xlu0 %440, %v364
  %v442 = vpop.permute.xlu0 %441
  %443 = vset.pattern.permute.xlu0 0
  %444 = vperm.xlu0 %443, %v365
  %v445 = vpop.permute.xlu0 %444
  %446 = vset.pattern.permute.xlu0 0
  %447 = vperm.xlu0 %446, %v366
  %v448 = vpop.permute.xlu0 %447
  %449 = vset.pattern.permute.xlu0 0
  %450 = vperm.xlu0 %449, %v367
  %v451 = vpop.permute.xlu0 %450
  %452 = vset.pattern.permute.xlu0 0
  %453 = vperm.xlu0 %452, %v368
  %v454 = vpop.permute.xlu0 %453
  %455 = vset.pattern.permute.xlu0 0
  %456 = vperm.xlu0 %455, %v369
  %v457 = vpop.permute.xlu0 %456
  %458 = vset.pattern.permute.xlu0 0
  %459 = vperm.xlu0 %458, %v370
  %v460 = vpop.permute.xlu0 %459
  %461 = vset.pattern.permute.xlu0 0
  %462 = vperm.xlu0 %461, %v371
  %v463 = vpop.permute.xlu0 %462
  %464 = vset.pattern.permute.xlu0 0
  %465 = vperm.xlu0 %464, %v372
  %v466 = vpop.permute.xlu0 %465
  %467 = vset.pattern.permute.xlu0 0
  %468 = vperm.xlu0 %467, %v373
  %v469 = vpop.permute.xlu0 %468
  %v470 = vlaneseq
  %v471 = vand.u32 %v470, 127
  %v472 = vlaneseq
  %v473 = vshrl.u32 %v472, 7
  %v474 = vsub.s32 %v471, %v473
  %v475 = vrot.slane %v400, %v474
  %v476 = vadd.s32 %v471, 4294967288
  %v477 = vlaneseq
  %v478 = vshrl.u32 %v477, 7
  %v479 = vsub.s32 %v476, %v478
  %v480 = vrot.slane %v403, %v479
  %vm481 = vcmask 130112
  %v482 = vsel %vm481, %v480, %v475
  %v483 = vadd.s32 %v471, 4294967280
  %v484 = vlaneseq
  %v485 = vshrl.u32 %v484, 7
  %v486 = vsub.s32 %v483, %v485
  %v487 = vrot.slane %v406, %v486
  %vm488 = vcmask 195712
  %v489 = vsel %vm488, %v487, %v482
  %v490 = vadd.s32 %v471, 4294967272
  %v491 = vlaneseq
  %v492 = vshrl.u32 %v491, 7
  %v493 = vsub.s32 %v490, %v492
  %v494 = vrot.slane %v409, %v493
  %vm495 = vcmask 261312
  %v496 = vsel %vm495, %v494, %v489
  %v497 = vadd.s32 %v471, 4294967264
  %v498 = vlaneseq
  %v499 = vshrl.u32 %v498, 7
  %v500 = vsub.s32 %v497, %v499
  %v501 = vrot.slane %v412, %v500
  %vm502 = vcmask 326912
  %v503 = vsel %vm502, %v501, %v496
  %v504 = vadd.s32 %v471, 4294967256
  %v505 = vlaneseq
  %v506 = vshrl.u32 %v505, 7
  %v507 = vsub.s32 %v504, %v506
  %v508 = vrot.slane %v415, %v507
  %vm509 = vcmask 392512
  %v510 = vsel %vm509, %v508, %v503
  %v511 = vlaneseq
  %v512 = vshrl.u32 %v511, 7
  %v513 = vsub.s32 %v471, %v512
  %v514 = vrot.slane %v418, %v513
  %v515 = vlaneseq
  %v516 = vshrl.u32 %v515, 7
  %v517 = vsub.s32 %v476, %v516
  %v518 = vrot.slane %v421, %v517
  %v519 = vsel %vm481, %v518, %v514
  %v520 = vlaneseq
  %v521 = vshrl.u32 %v520, 7
  %v522 = vsub.s32 %v483, %v521
  %v523 = vrot.slane %v424, %v522
  %v524 = vsel %vm488, %v523, %v519
  %v525 = vlaneseq
  %v526 = vshrl.u32 %v525, 7
  %v527 = vsub.s32 %v490, %v526
  %v528 = vrot.slane %v427, %v527
  %v529 = vsel %vm495, %v528, %v524
  %v530 = vlaneseq
  %v531 = vshrl.u32 %v530, 7
  %v532 = vsub.s32 %v497, %v531
  %v533 = vrot.slane %v430, %v532
  %v534 = vsel %vm502, %v533, %v529
  %v535 = vlaneseq
  %v536 = vshrl.u32 %v535, 7
  %v537 = vsub.s32 %v504, %v536
  %v538 = vrot.slane %v433, %v537
  %v539 = vsel %vm509, %v538, %v534
  %v540 = vlaneseq
  %v541 = vshrl.u32 %v540, 7
  %v542 = vsub.s32 %v471, %v541
  %v543 = vrot.slane %v436, %v542
  %v544 = vlaneseq
  %v545 = vshrl.u32 %v544, 7
  %v546 = vsub.s32 %v476, %v545
  %v547 = vrot.slane %v439, %v546
  %v548 = vsel %vm481, %v547, %v543
  %v549 = vlaneseq
  %v550 = vshrl.u32 %v549, 7
  %v551 = vsub.s32 %v483, %v550
  %v552 = vrot.slane %v442, %v551
  %v553 = vsel %vm488, %v552, %v548
  %v554 = vlaneseq
  %v555 = vshrl.u32 %v554, 7
  %v556 = vsub.s32 %v490, %v555
  %v557 = vrot.slane %v445, %v556
  %v558 = vsel %vm495, %v557, %v553
  %v559 = vlaneseq
  %v560 = vshrl.u32 %v559, 7
  %v561 = vsub.s32 %v497, %v560
  %v562 = vrot.slane %v448, %v561
  %v563 = vsel %vm502, %v562, %v558
  %v564 = vlaneseq
  %v565 = vshrl.u32 %v564, 7
  %v566 = vsub.s32 %v504, %v565
  %v567 = vrot.slane %v451, %v566
  %v568 = vsel %vm509, %v567, %v563
  %v569 = vlaneseq
  %v570 = vshrl.u32 %v569, 7
  %v571 = vsub.s32 %v471, %v570
  %v572 = vrot.slane %v454, %v571
  %v573 = vlaneseq
  %v574 = vshrl.u32 %v573, 7
  %v575 = vsub.s32 %v476, %v574
  %v576 = vrot.slane %v457, %v575
  %v577 = vsel %vm481, %v576, %v572
  %v578 = vlaneseq
  %v579 = vshrl.u32 %v578, 7
  %v580 = vsub.s32 %v483, %v579
  %v581 = vrot.slane %v460, %v580
  %v582 = vsel %vm488, %v581, %v577
  %v583 = vlaneseq
  %v584 = vshrl.u32 %v583, 7
  %v585 = vsub.s32 %v490, %v584
  %v586 = vrot.slane %v463, %v585
  %v587 = vsel %vm495, %v586, %v582
  %v588 = vlaneseq
  %v589 = vshrl.u32 %v588, 7
  %v590 = vsub.s32 %v497, %v589
  %v591 = vrot.slane %v466, %v590
  %v592 = vsel %vm502, %v591, %v587
  %v593 = vlaneseq
  %v594 = vshrl.u32 %v593, 7
  %v595 = vsub.s32 %v504, %v594
  %v596 = vrot.slane %v469, %v595
  %v597 = vsel %vm509, %v596, %v592
  %vm598 = vcmask 1041409
  %v599 = vsel %vm598, %v539, %v510
  %vm600 = vcmask 1042434
  %v601 = vsel %vm600, %v568, %v599
  %vm602 = vcmask 1043459
  %v603 = vsel %vm602, %v597, %v601
  %vm605 = vcmask 388096
  %v606 = vsel %vm605, %v603, 0.0
  %607 = vadd.xlane.f32.xlu0 %v606
  %v608 = vpop.xlane.xlu0 %607
  %vm609 = vcmask 3072
  %610 = vst.msk [vmem:[%s4] sm:$0xf] %vm609, %v608
  // Predicated region
  $region18: #{tpu_custom_call.1} parent=0 // pred_check
    _
  $region19: #{tpu_custom_call.1} parent=0 // pred_check_branch
    %612 = sbr.rel (0) target = $region21
  $region20: #{tpu_custom_call.1} parent=0 // pred_region
    _
  $region21: #{tpu_custom_call.1} parent=0 // pred_fallthru
    _
  // Predicated region
  $region22: #{tpu_custom_call.1} parent=0 // pred_check
    _
  $region23: #{tpu_custom_call.1} parent=0 // pred_check_branch
    %614 = sbr.rel (0) target = $region25
  $region24: #{tpu_custom_call.1} parent=0 // pred_region
    _
  $region25: #{tpu_custom_call.1} parent=0 // pred_fallthru
    _

</llo_original>
